<compile_context>
chip_gen: v7x
topology: tpu7x:2x2x1
jax: 0.10.0
libtpu: 0.0.40
codegen_flags: <defaults>
</compile_context>

<pallas_src>
import jax
import jax.numpy as jnp
import numpy as np
from jax.experimental import pallas as pl
from jax.experimental.pallas import tpu as pltpu


def _make_distilling_loss_kernel(batch_size):
    inv_b = 1.0 / float(batch_size)

    def kernel(x_ref, t_ref, out_ref):
        i = pl.program_id(0)
        j = pl.program_id(1)

        # First grid step: zero the resident scalar accumulator.
        @pl.when(jnp.logical_and(i == 0, j == 0))
        def _init():
            out_ref[...] = jnp.zeros_like(out_ref)

        x = x_ref[...]                     # (tm, tn) f32 tile of `input`
        t = t_ref[...]                     # (tm, tn) f32 tile of `target`
        # sum over this tile of -target * log(input):
        #   log -> EUP slot, multiply -> VPU slot, full reduce -> XLU slot,
        # all hidden behind the streaming HBM DMAs (kernel is mem-bound).
        out_ref[...] += jnp.sum(-t * jnp.log(x), keepdims=True)   # (1, 1)

        # Last grid step: convert the running sum into the batch mean.
        @pl.when(jnp.logical_and(i == pl.num_programs(0) - 1,
                                 j == pl.num_programs(1) - 1))
        def _finalize():
            out_ref[...] = out_ref[...] * inv_b

    return kernel


def _pick_tile(dim, preferred, align):
    """Largest tile <= `preferred` that divides `dim` and is `align`-aligned;
    falls back to the full extent (always a legal block shape)."""
    if dim <= preferred:
        return dim
    t = (preferred // align) * align
    while t >= align:
        if dim % t == 0:
            return t
        t -= align
    return dim


def distilling_loss(inp, target, *, tm=None, tn=None):
    """loss = mean_i sum_j -target[i, j] * log(inp[i, j])   (scalar f32)."""
    assert inp.ndim == 2 and inp.shape == target.shape
    B, C = inp.shape
    inp = inp.astype(jnp.float32)
    target = target.astype(jnp.float32)

    if tm is None:
        tm = _pick_tile(B, 256, 8)       # sublane-aligned batch tile
    if tn is None:
        tn = _pick_tile(C, 2048, 128)    # lane-dense class tile
    grid = (B // tm, C // tn)

    kernel = _make_distilling_loss_kernel(B)
    out = pl.pallas_call(
        kernel,
        out_shape=jax.ShapeDtypeStruct((1, 1), jnp.float32),
        grid_spec=pltpu.PrefetchScalarGridSpec(
            num_scalar_prefetch=0,
            grid=grid,
            in_specs=[
                pl.BlockSpec((tm, tn), lambda i, j: (i, j)),   # input
                pl.BlockSpec((tm, tn), lambda i, j: (i, j)),   # target
            ],
            # Same block index for every grid step -> resident accumulator.
            out_specs=pl.BlockSpec((1, 1), lambda i, j: (0, 0)),
        ),
        compiler_params=pltpu.CompilerParams(
            # The scalar output is resident across the whole grid, so both
            # axes are reduction axes -> "arbitrary" (no megacore split is
            # possible for a single-scalar accumulator).
            dimension_semantics=("arbitrary", "arbitrary"),
            vmem_limit_bytes=32 * 1024 * 1024,
        ),
        cost_estimate=pl.CostEstimate(
            flops=2 * B * C,              # one multiply + one add per element
            transcendentals=B * C,        # one log per element
            bytes_accessed=2 * B * C * 4 + 4,
        ),
    )(inp, target)
    return out[0, 0]


def _reference(inp, target):
    """Pure-JAX replica of the PyTorch forward, for checking."""
    return jnp.mean(jnp.sum(-target * jnp.log(inp), axis=1))


if __name__ == "__main__":
    B, C = 16, 512

    key = jax.random.PRNGKey(0)
    k1, k2 = jax.random.split(key)

    # `input` must be strictly positive (it is log()'d); use softmax rows.
    inp = jax.nn.softmax(jax.random.normal(k1, (B, C), dtype=jnp.float32), axis=-1)
    target = jax.nn.softmax(jax.random.normal(k2, (B, C), dtype=jnp.float32), axis=-1)

    # Tiled path: grid = (2, 4), exercises the pipelined reduction.
    loss_tiled = distilling_loss(inp, target, tm=8, tn=128)
    loss_tiled = jax.block_until_ready(loss_tiled)

    # Auto-tile path (full-extent blocks at this small shape, grid = (1, 1)).
    loss_auto = distilling_loss(inp, target)
    loss_auto = jax.block_until_ready(loss_auto)

    ref = _reference(inp, target)
    np.testing.assert_allclose(np.asarray(loss_tiled), np.asarray(ref),
                               rtol=1e-3, atol=1e-3)
    np.testing.assert_allclose(np.asarray(loss_auto), np.asarray(ref),
                               rtol=1e-3, atol=1e-3)

    print("KERNEL_OK")
</pallas_src>

<mosaic_0001>
module attributes {stable_mosaic.version = 11 : i64} {
  func.func @kernel(%arg0: i32, %arg1: i32, %arg2: memref<8x128xf32, #tpu.memory_space<vmem>>, %arg3: memref<8x128xf32, #tpu.memory_space<vmem>>, %arg4: memref<1x1xf32, #tpu.memory_space<vmem>>) attributes {dimension_semantics = [#tpu.dimension_semantics<arbitrary>, #tpu.dimension_semantics<arbitrary>], iteration_bounds = array<i64: 2, 4>, scalar_prefetch = 0 : i64, scratch_operands = 0 : i64, tpu.core_type = #tpu.core_type<tc>, window_params = [{transform_indices = @transform_0, window_bounds = array<i64: 8, 128>}, {transform_indices = @transform_1, window_bounds = array<i64: 8, 128>}, {pipeline_mode = #tpu.pipeline_mode<synchronous>, transform_indices = @transform_2, window_bounds = array<i64: 1, 1>}]} {
    %c0_i32 = arith.constant 0 : i32
    %0 = arith.cmpi eq, %arg0, %c0_i32 : i32
    %c0_i32_0 = arith.constant 0 : i32
    %1 = arith.cmpi eq, %arg1, %c0_i32_0 : i32
    %2 = arith.andi %0, %1 : i1
    %3 = arith.extui %2 : i1 to i32
    %c0_i32_1 = arith.constant 0 : i32
    %4 = arith.cmpi ne, %3, %c0_i32_1 : i32
    scf.if %4 {
      %cst_11 = arith.constant 0.000000e+00 : f32
      %24 = vector.broadcast %cst_11 : f32 to vector<1x1xf32>
      %c0_12 = arith.constant 0 : index
      %c0_13 = arith.constant 0 : index
      %25 = vector.load %arg4[%c0_12, %c0_13] : memref<1x1xf32, #tpu.memory_space<vmem>>, vector<1x1xf32>
      tpu.vector_store %arg4[%c0_12, %c0_13], %24 {strides = array<i32>} : memref<1x1xf32, #tpu.memory_space<vmem>>, vector<1x1xf32>,
    } else {
    }
    %c0 = arith.constant 0 : index
    %c0_2 = arith.constant 0 : index
    %5 = vector.load %arg2[%c0, %c0_2] : memref<8x128xf32, #tpu.memory_space<vmem>>, vector<8x128xf32>
    %c0_3 = arith.constant 0 : index
    %c0_4 = arith.constant 0 : index
    %6 = vector.load %arg3[%c0_3, %c0_4] : memref<8x128xf32, #tpu.memory_space<vmem>>, vector<8x128xf32>
    %c0_5 = arith.constant 0 : index
    %c0_6 = arith.constant 0 : index
    %7 = vector.load %arg4[%c0_5, %c0_6] : memref<1x1xf32, #tpu.memory_space<vmem>>, vector<1x1xf32>
    %cst = arith.constant 0.000000e+00 : f32
    %8 = vector.broadcast %cst : f32 to vector<8x128xf32>
    %9 = arith.subf %8, %6 : vector<8x128xf32>
    %10 = math.log %5 : vector<8x128xf32>
    %11 = arith.mulf %9, %10 : vector<8x128xf32>
    %12 = vector.shape_cast %11 : vector<8x128xf32> to vector<1x8x128xf32>
    %cst_7 = arith.constant dense<0.000000e+00> : vector<1xf32>
    %13 = vector.multi_reduction <add>, %12, %cst_7 [1, 2] : vector<1x8x128xf32> to vector<1xf32>
    %14 = vector.shape_cast %13 : vector<1xf32> to vector<1x1x1xf32>
    %15 = vector.extract %14[0, 0, 0] : f32 from vector<1x1x1xf32>
    %16 = vector.broadcast %15 : f32 to vector<1x1xf32>
    %17 = arith.addf %7, %16 : vector<1x1xf32>
    %c0_8 = arith.constant 0 : index
    %c0_9 = arith.constant 0 : index
    %18 = vector.load %arg4[%c0_8, %c0_9] : memref<1x1xf32, #tpu.memory_space<vmem>>, vector<1x1xf32>
    tpu.vector_store %arg4[%c0_8, %c0_9], %17 {strides = array<i32>} : memref<1x1xf32, #tpu.memory_space<vmem>>, vector<1x1xf32>,
    %c1_i32 = arith.constant 1 : i32
    %19 = arith.cmpi eq, %arg0, %c1_i32 : i32
    %c3_i32 = arith.constant 3 : i32
    %20 = arith.cmpi eq, %arg1, %c3_i32 : i32
    %21 = arith.andi %19, %20 : i1
    %22 = arith.extui %21 : i1 to i32
    %c0_i32_10 = arith.constant 0 : i32
    %23 = arith.cmpi ne, %22, %c0_i32_10 : i32
    scf.if %23 {
      %c0_11 = arith.constant 0 : index
      %c0_12 = arith.constant 0 : index
      %24 = vector.load %arg4[%c0_11, %c0_12] : memref<1x1xf32, #tpu.memory_space<vmem>>, vector<1x1xf32>
      %cst_13 = arith.constant 6.250000e-02 : f32
      %25 = vector.broadcast %cst_13 : f32 to vector<1x1xf32>
      %26 = arith.mulf %24, %25 : vector<1x1xf32>
      %c0_14 = arith.constant 0 : index
      %c0_15 = arith.constant 0 : index
      %27 = vector.load %arg4[%c0_14, %c0_15] : memref<1x1xf32, #tpu.memory_space<vmem>>, vector<1x1xf32>
      tpu.vector_store %arg4[%c0_14, %c0_15], %26 {strides = array<i32>} : memref<1x1xf32, #tpu.memory_space<vmem>>, vector<1x1xf32>,
    } else {
    }
    return
  }
  func.func @transform_0(%arg0: i32, %arg1: i32) -> (i32, i32) {
    %c0_i32 = arith.constant 0 : i32
    return %arg0, %arg1 : i32, i32
  }
  func.func @transform_1(%arg0: i32, %arg1: i32) -> (i32, i32) {
    %c0_i32 = arith.constant 0 : i32
    return %arg0, %arg1 : i32, i32
  }
  func.func @transform_2(%arg0: i32, %arg1: i32) -> (i32, i32) {
    %c0_i32 = arith.constant 0 : i32
    %c0_i32_0 = arith.constant 0 : i32
    %c0_i32_1 = arith.constant 0 : i32
    return %c0_i32, %c0_i32_0 : i32, i32
  }
}

</mosaic_0001>

<llo_original>
// kernel: tpu_custom_call.1
$region0: #{tpu_custom_call.1}
  #allocation0 [shape = 'u32[]', space=smem, size = 0x4, offset = 0x4, fixed_abs, tag = 'smem constant byte address 0x4 - core index']
  #allocation1 [shape = 'u32[144,128]{1,0:T(1,128)}', space=vmem, size = 0x12000, scoped, tag = 'internal scratch']
  %s0 = inlined_call_operand.hbm [shape: f32[16,512], index: 0, kind: input, shape index: {}]
  %s1 = inlined_call_operand.hbm [shape: f32[16,512], index: 1, kind: input, shape index: {}]
  %s2 = inlined_call_operand.hbm [shape: f32[1,1], index: 2, kind: output, shape index: {}]
  %s3 = sld [smem:[#allocation0]]
  $region57: #{tpu_custom_call.1} parent=0
    _
  %s5 = ssub.s32 1, %s3
  %s6 = scalar_select 0, %s5, %s3
  $region1: #{tpu_custom_call.1} parent=0
    #allocation2 [shape = 'u8[8192]{0}', space=vmem, size = 0x2000, scoped, tag = 'input window, operand 0']
    #allocation3 [shape = 's32[2]{0}', space=sflag, size = 0x8, scoped, tag = 'scoped memory for tpu_custom_call.1']
    #allocation4 [shape = 's32[2]{0}', space=sflag, size = 0x8, scoped, tag = 'scoped memory for tpu_custom_call.1']
    #allocation5 [shape = 'u8[8192]{0}', space=vmem, size = 0x2000, scoped, tag = 'input window, operand 1']
    #allocation6 [shape = 's32[2]{0}', space=sflag, size = 0x8, scoped, tag = 'scoped memory for tpu_custom_call.1']
    #allocation7 [shape = 'u8[512]{0}', space=vmem, size = 0x400, scoped, tag = 'output window, operand 0, single buffered']
    %7 = vsyncpa [#allocation3], 0
    %s8 = scalar_lea.sflag [#allocation3], 1
    %9 = vsyncpa %s8, 0
    %10 = vsyncpa [#allocation6], 0
    %s11 = scalar_lea.sflag [#allocation6], 1
    %12 = vsyncpa %s11, 0
    %13 = vsyncpa [#allocation4], 0
    loop: start=0, step=1, limit=10
    $region2: #{tpu_custom_call.1} parent=1 // loop_pre_header
      _
    $region3: #{tpu_custom_call.1} parent=1 // loop_header
      %s15 = sphi 0, %s19
      %p16 = scmp.ge.s32.totalorder %s15, 10
      %s22 = sphi 0, %s34
      %s23 = sphi 0, %s30
      %s24 = sphi 0, %s22
      %s25 = sphi 0, %s23
      %s26 = sphi 0, %s24
      %s27 = sphi 0, %s25
      %s39 = sphi 0, %s41
      %s42 = sphi 0, %s39
      %s43 = sphi 0, %s42
      %s59 = sphi 0, %s43
      %s67 = sphi 0, %s69
      %s70 = sphi 0, %s67
      %s71 = sphi 0, %s70
      %s87 = sphi 0, %s71
      %s91 = sphi 0, %s91
      %s93 = sphi 0, %s91
      %s94 = sphi 0, %s93
      %s108 = sphi 0, %s94
    $region4: #{tpu_custom_call.1} parent=1 // loop_header_branch
      %18 = sbr.rel (%p16) target = $region8
    $region5: #{tpu_custom_call.1} parent=1 // loop_body
      %s20 = ssub.s32 %s15, 1
      %s21 = ssub.s32 %s15, 2
      %s28 = sadd.s32 1, %s23
      %p29 = scmp.ge.s32.totalorder %s28, 4
      %s30 = scalar_select %p29, 0, %s28
      %s31 = sadd.s32 1, %s22
      %s32 = scalar_select %p29, %s31, %s22
      %p33 = scmp.ge.s32.totalorder %s32, 2
      %s34 = scalar_select %p33, 0, %s32
      %s35 = ssub.s32 %s22, %s34
      %s36 = ssub.s32 %s23, %s30
      %s37 = sor.u32 %s35, %s36
      %p38 = scmp.eq.s32.totalorder %s37, 0
      %s40 = sadd.s32 %s39, 1
      %s41 = scalar_select %p38, %s39, %s40
      %p44 = pneg %p38
      %p45 = scmp.eq.s32.totalorder %s15, 7
      %p46 = por %p44, %p45
      %p47 = scmp.ne.s32.totalorder %s39, %s42
      %p48 = scmp.eq.s32.totalorder %s15, 0
      %p49 = por %p47, %p48
      %p50 = scmp.ne.s32.totalorder %s39, %s42
      %p51 = scmp.eq.s32.totalorder %s20, 7
      %p52 = por %p50, %p51
      %p53 = scmp.ne.s32.totalorder %s42, %s43
      %p54 = scmp.eq.s32.totalorder %s20, 0
      %p55 = por %p53, %p54
      %p56 = scmp.ne.s32.totalorder %s42, %s43
      %p57 = scmp.eq.s32.totalorder %s21, 7
      %p58 = por %p56, %p57
      %p60 = scmp.ne.s32.totalorder %s43, %s59
      %p61 = scmp.eq.s32.totalorder %s21, 0
      %p62 = por %p60, %p61
      %s63 = ssub.s32 %s22, %s34
      %s64 = ssub.s32 %s23, %s30
      %s65 = sor.u32 %s63, %s64
      %p66 = scmp.eq.s32.totalorder %s65, 0
      %s68 = sadd.s32 %s67, 1
      %s69 = scalar_select %p66, %s67, %s68
      %p72 = pneg %p66
      %p73 = scmp.eq.s32.totalorder %s15, 7
      %p74 = por %p72, %p73
      %p75 = scmp.ne.s32.totalorder %s67, %s70
      %p76 = scmp.eq.s32.totalorder %s15, 0
      %p77 = por %p75, %p76
      %p78 = scmp.ne.s32.totalorder %s67, %s70
      %p79 = scmp.eq.s32.totalorder %s20, 7
      %p80 = por %p78, %p79
      %p81 = scmp.ne.s32.totalorder %s70, %s71
      %p82 = scmp.eq.s32.totalorder %s20, 0
      %p83 = por %p81, %p82
      %p84 = scmp.ne.s32.totalorder %s70, %s71
      %p85 = scmp.eq.s32.totalorder %s21, 7
      %p86 = por %p84, %p85
      %p88 = scmp.ne.s32.totalorder %s71, %s87
      %p89 = scmp.eq.s32.totalorder %s21, 0
      %p90 = por %p88, %p89
      %s92 = sadd.s32 %s91, 1
      %p95 = scmp.eq.s32.totalorder %s15, 7
      %p96 = scmp.ne.s32.totalorder %s91, %s93
      %p97 = scmp.eq.s32.totalorder %s15, 0
      %p98 = por %p96, %p97
      %p99 = scmp.ne.s32.totalorder %s91, %s93
      %p100 = scmp.eq.s32.totalorder %s20, 7
      %p101 = por %p99, %p100
      %p102 = scmp.ne.s32.totalorder %s93, %s94
      %p103 = scmp.eq.s32.totalorder %s20, 0
      %p104 = por %p102, %p103
      %p105 = scmp.ne.s32.totalorder %s93, %s94
      %p106 = scmp.eq.s32.totalorder %s21, 7
      %p107 = por %p105, %p106
      %p109 = scmp.ne.s32.totalorder %s94, %s108
      %p110 = scmp.eq.s32.totalorder %s21, 0
      %p111 = por %p109, %p110
      %p112 = scmp.le.s32.totalorder 1, %s15
      %p113 = scmp.lt.s32.totalorder %s15, 9
      %p114 = pnand %p112, %p113
      %p115 = pneg %p114
      // Predicated region
      $region9: #{tpu_custom_call.1} parent=5 // pred_check
        _
      $region10: #{tpu_custom_call.1} parent=5 // pred_check_branch
        %117 = sbr.rel (%p114) target = $region12
      $region11: #{tpu_custom_call.1} parent=5 // pred_region
        %s118 = ssub.s32 %s15, 1
      $region12: #{tpu_custom_call.1} parent=5 // pred_fallthru
        _
      %p119 = scmp.lt.s32.totalorder %s15, 8
      // Predicated region
      $region13: #{tpu_custom_call.1} parent=5 // pred_check
        %p120 = pneg %p119
      $region14: #{tpu_custom_call.1} parent=5 // pred_check_branch
        %122 = sbr.rel (%p120) target = $region16
      $region15: #{tpu_custom_call.1} parent=5 // pred_region
        // Predicated region
        $region17: #{tpu_custom_call.1} parent=15 // pred_check
          %p123 = pneg %p49
        $region18: #{tpu_custom_call.1} parent=15 // pred_check_branch
          %125 = sbr.rel (%p123) target = $region20
        $region19: #{tpu_custom_call.1} parent=15 // pred_region
          %s126 = sand.u32 %s39, 1
          %s127 = scalar_lea.sflag [#allocation3], %s126
          %s128 = sand.u32 %s39, 1
          %s129 = smul.addr %s128, 8
          %s130 = scalar_lea.vmem [#allocation2], %s129
          %s132 = ssub.s32 128, 128
          %133 = vsyncadd %s127, %s132
          %s134 = smul.addr %s22, 4
          %s135 = sadd.s32 %s23, %s134
          %s136 = smul.addr %s135, 128
          %s137 = scalar_lea.hbm %s0, %s136
          %s139 = sshll.u32 %s130, 4
          %s140 = int_to_ptr.vmem [resolvable:$true] %s139
          %142 = dma.hbm_to_vmem [thread:$0]  %s137, 128, %s140, %s127
        $region20: #{tpu_custom_call.1} parent=15 // pred_fallthru
          _
        // Predicated region
        $region21: #{tpu_custom_call.1} parent=15 // pred_check
          %p143 = pneg %p77
        $region22: #{tpu_custom_call.1} parent=15 // pred_check_branch
          %145 = sbr.rel (%p143) target = $region24
        $region23: #{tpu_custom_call.1} parent=15 // pred_region
          %s146 = sand.u32 %s67, 1
          %s147 = scalar_lea.sflag [#allocation6], %s146
          %s148 = sand.u32 %s67, 1
          %s149 = smul.addr %s148, 8
          %s150 = scalar_lea.vmem [#allocation5], %s149
          %s152 = ssub.s32 128, 128
          %153 = vsyncadd %s147, %s152
          %s154 = smul.addr %s22, 4
          %s155 = sadd.s32 %s23, %s154
          %s156 = smul.addr %s155, 128
          %s157 = scalar_lea.hbm %s1, %s156
          %s159 = sshll.u32 %s150, 4
          %s160 = int_to_ptr.vmem [resolvable:$true] %s159
          %162 = dma.hbm_to_vmem [thread:$0]  %s157, 128, %s160, %s147
        $region24: #{tpu_custom_call.1} parent=15 // pred_fallthru
          _
      $region16: #{tpu_custom_call.1} parent=5 // pred_fallthru
        _
      %p163 = scmp.le.s32.totalorder 1, %s15
      %p164 = scmp.lt.s32.totalorder %s15, 9
      %p165 = pnand %p163, %p164
      %p166 = pneg %p165
      // Predicated region
      $region25: #{tpu_custom_call.1} parent=5 // pred_check
        _
      $region26: #{tpu_custom_call.1} parent=5 // pred_check_branch
        %168 = sbr.rel (%p165) target = $region28
      $region27: #{tpu_custom_call.1} parent=5 // pred_region
        %s169 = ssub.s32 %s15, 1
        %s170 = sand.u32 %s42, 1
        %s171 = scalar_lea.sflag [#allocation3], %s170
        %s172 = sand.u32 %s42, 1
        %s173 = smul.addr %s172, 8
        %s174 = scalar_lea.vmem [#allocation2], %s173
        // Predicated region
        $region29: #{tpu_custom_call.1} parent=27 // pred_check
          %p175 = pneg %p55
        $region30: #{tpu_custom_call.1} parent=27 // pred_check_branch
          %177 = sbr.rel (%p175) target = $region32
        $region31: #{tpu_custom_call.1} parent=27 // pred_region
          %178 = dma.done %s171, 128
        $region32: #{tpu_custom_call.1} parent=27 // pred_fallthru
          _
        %s179 = sand.u32 %s70, 1
        %s180 = scalar_lea.sflag [#allocation6], %s179
        %s181 = sand.u32 %s70, 1
        %s182 = smul.addr %s181, 8
        %s183 = scalar_lea.vmem [#allocation5], %s182
        // Predicated region
        $region33: #{tpu_custom_call.1} parent=27 // pred_check
          %p184 = pneg %p83
        $region34: #{tpu_custom_call.1} parent=27 // pred_check_branch
          %186 = sbr.rel (%p184) target = $region36
        $region35: #{tpu_custom_call.1} parent=27 // pred_region
          %187 = dma.done %s180, 128
        $region36: #{tpu_custom_call.1} parent=27 // pred_fallthru
          _
        %s188 = sand.u32 %s42, 1
        %s189 = scalar_lea.sflag [#allocation3], %s188
        %s190 = sand.u32 %s42, 1
        %s191 = smul.addr %s190, 8
        %s192 = scalar_lea.vmem [#allocation2], %s191
        %p193 = pneg %p55
        %p194 = pneg %p52
        %s195 = sand.u32 %s70, 1
        %s196 = scalar_lea.sflag [#allocation6], %s195
        %s197 = sand.u32 %s70, 1
        %s198 = smul.addr %s197, 8
        %s199 = scalar_lea.vmem [#allocation5], %s198
        %p200 = pneg %p83
        %p201 = pneg %p80
        %p202 = pneg %p104
        %p203 = pneg %p101
        %p204 = scmp.eq.s32.totalorder %s24, 0
        %p205 = scmp.eq.s32.totalorder %s25, 0
        %p206 = pnand %p204, %p205
        %p207 = pneg %p206
        // Predicated region
        $region37: #{tpu_custom_call.1} parent=27 // pred_check
          _
        $region38: #{tpu_custom_call.1} parent=27 // pred_check_branch
          %209 = sbr.rel (%p206) target = $region40
        $region39: #{tpu_custom_call.1} parent=27 // pred_region
          %vm210 = vcmask 0
          %211 = vst.msk [vmem:[#allocation7] sm:$0x1] %vm210, 0.0
        $region40: #{tpu_custom_call.1} parent=27 // pred_fallthru
          _
        %v212 = vld [vmem:[%s174] sm:$0xff]
        %v213 = vld [vmem:[%s183] sm:$0xff]
        %v214 = vld [vmem:[#allocation7] sm:$0x1]
        %v215 = vsub.f32 0.0, %v213
        %v216 = vlog2.pop %v212
        %v217 = vmul.f32 %v216, 0.6931472
        %v218 = vmul.f32 %v215, %v217
        %219 = vadd.xlane.f32.xlu0 %v218
        %v220 = vpop.xlane.xlu0 %219
        %v221 = vrot.slane %v220, 4
        %v222 = vadd.f32 %v220, %v221
        %v223 = vrot.slane %v222, 2
        %v224 = vadd.f32 %v222, %v223
        %v225 = vrot.slane %v224, 1
        %v226 = vadd.f32 %v224, %v225
        %s227 = vtos %v226
        %v228 = vstv %s227
        %v229 = vadd.f32 %v214, %v228
        %vm230 = vcmask 0
        %231 = vst.msk [vmem:[#allocation7] sm:$0x1] %vm230, %v229
        %p232 = scmp.eq.s32.totalorder %s24, 1
        %p233 = scmp.eq.s32.totalorder %s25, 3
        %p234 = pnand %p232, %p233
        %p235 = pneg %p234
        // Predicated region
        $region41: #{tpu_custom_call.1} parent=27 // pred_check
          _
        $region42: #{tpu_custom_call.1} parent=27 // pred_check_branch
          %237 = sbr.rel (%p234) target = $region44
        $region43: #{tpu_custom_call.1} parent=27 // pred_region
          %v238 = vld [vmem:[#allocation7] sm:$0x1]
          %v239 = vmul.f32 %v238, 0.0625
          %240 = vst.msk [vmem:[#allocation7] sm:$0x1] %vm230, %v239
        $region44: #{tpu_custom_call.1} parent=27 // pred_fallthru
          _
        // Predicated region
        $region45: #{tpu_custom_call.1} parent=27 // pred_check
          %p241 = pneg %p101
        $region46: #{tpu_custom_call.1} parent=27 // pred_check_branch
          %243 = sbr.rel (%p241) target = $region48
        $region47: #{tpu_custom_call.1} parent=27 // pred_region
          %s245 = ssub.s32 16, 16
          %246 = vsyncadd [#allocation4], %s245
          %s248 = sshll.u32 [#allocation7], 4
          %s249 = int_to_ptr.vmem [resolvable:$true] %s248
          %251 = dma.vmem_to_hbm [thread:$0]  %s249, 16, %s2, [#allocation4]
        $region48: #{tpu_custom_call.1} parent=27 // pred_fallthru
          _
        // Predicated region
        $region49: #{tpu_custom_call.1} parent=27 // pred_check
          %p252 = pneg %p101
        $region50: #{tpu_custom_call.1} parent=27 // pred_check_branch
          %254 = sbr.rel (%p252) target = $region52
        $region51: #{tpu_custom_call.1} parent=27 // pred_region
          %255 = dma.done [#allocation4], 16
        $region52: #{tpu_custom_call.1} parent=27 // pred_fallthru
          _
      $region28: #{tpu_custom_call.1} parent=5 // pred_fallthru
        _
      %p256 = scmp.le.s32.totalorder 2, %s15
      // Predicated region
      $region53: #{tpu_custom_call.1} parent=5 // pred_check
        %p257 = pneg %p256
      $region54: #{tpu_custom_call.1} parent=5 // pred_check_branch
        %259 = sbr.rel (%p257) target = $region56
      $region55: #{tpu_custom_call.1} parent=5 // pred_region
        %s260 = ssub.s32 %s15, 2
      $region56: #{tpu_custom_call.1} parent=5 // pred_fallthru
        _
    $region6: #{tpu_custom_call.1} parent=1 // loop_footer
      %s19 = sadd.s32 1, %s15
    $region7: #{tpu_custom_call.1} parent=1 // loop_footer_branch
      %14 = sbr.rel target = $region3
    $region8: #{tpu_custom_call.1} parent=1 // loop_exit
      _
    %261 = vsyncpa [#allocation3], 1
    %s262 = scalar_lea.sflag [#allocation3], 1
    %263 = vsyncpa %s262, 1
    %264 = vsyncpa [#allocation6], 1
    %s265 = scalar_lea.sflag [#allocation6], 1
    %266 = vsyncpa %s265, 1
    %267 = vsyncpa [#allocation4], 1
    %s268 = scalar_lea.sflag [#allocation4], 1
    %269 = vsyncpa %s268, 1

</llo_original>
